<compile_context>
chip_gen: v7x
topology: tpu7x:2x2x1
jax: 0.10.0
libtpu: 0.0.40
codegen_flags: <defaults>
</compile_context>

<pallas_src>
import functools
import math

import jax
import jax.numpy as jnp
from jax import lax
from jax.experimental import pallas as pl
from jax.experimental.pallas import tpu as pltpu

BN_EPS = 1e-5
_SQRT_2_OVER_PI = math.sqrt(2.0 / math.pi)


def _gelu(x):
    # TODO(synk): PyTorch F.gelu defaults to the exact erf form; the tanh
    # approximation (max abs deviation ~3e-4) is used because erf is not a
    # guaranteed Mosaic lowering.  The pure-JAX reference uses the same formula.
    return 0.5 * x * (1.0 + jnp.tanh(_SQRT_2_OVER_PI * (x + 0.044715 * x * x * x)))


def _conv_block_kernel(x_ref, w0_ref, w1_ref, p_ref, o_ref, *,
                       t_valid, residual0, compute_dtype, tail_dtype):
    """One batch element per grid step.

    x_ref : (C_in, T_pad)     input slab (f32 or bf16)
    w0_ref: (C_out, 3*C_in)   conv0 weights, tap-major columns [t-1 | t | t+1]
    w1_ref: (C_out, 3*C_out)  conv1 weights, same layout
    p_ref : (C_out, 4)        [bn0_scale, bn0_shift', bn1_scale, bn1_shift']
                              (conv biases already folded into the shifts)
    o_ref : (C_out, T_pad)
    """
    t_pad = x_ref.shape[-1]

    p = p_ref[...].astype(tail_dtype)                       # (C_out, 4)
    s0, t0 = p[:, 0:1], p[:, 1:2]
    s1, t1 = p[:, 2:3], p[:, 3:4]

    # (1, T) boundary masks (broadcast over channels) wrt the TRUE length, so
    # 'same' zero padding is exact even when T was padded up to a 128-multiple.
    col = lax.broadcasted_iota(jnp.int32, (1, t_pad), 1)
    first_col = col == 0
    last_col = col == (t_valid - 1)

    def conv_same(h, w_all):
        # im2col: stack the three taps along sublanes, single MXU contraction.
        prev = jnp.where(first_col, 0.0, pltpu.roll(h, 1, axis=1))         # h[:, t-1]
        nxt = jnp.where(last_col, 0.0, pltpu.roll(h, t_pad - 1, axis=1))   # h[:, t+1]
        stacked = jnp.concatenate([prev, h, nxt], axis=0)                  # (3*C, T)
        return jnp.dot(w_all, stacked, preferred_element_type=jnp.float32)

    x = x_ref[...]
    z = conv_same(x.astype(compute_dtype), w0_ref[...])     # (C_out, T) f32
    if residual0:                                            # in_dim == out_dim
        z = z + x.astype(jnp.float32)
    a = _gelu(z.astype(tail_dtype) * s0 + t0)                # folded BN0 + GELU

    z = conv_same(a.astype(compute_dtype), w1_ref[...])
    z = z + a.astype(jnp.float32)                            # conv1 residual
    out = _gelu(z.astype(tail_dtype) * s1 + t1)              # folded BN1 + GELU
    o_ref[...] = out.astype(o_ref.dtype)                     # dropout = identity (eval)


def _fold_batchnorm(gamma, beta, mean, var, eps=BN_EPS):
    scale = gamma * lax.rsqrt(var + eps)
    shift = beta - mean * scale
    return scale, shift


def conv_block_pallas(x, params, *, compute_dtype=jnp.float32,
                      tail_dtype=jnp.float32, out_dtype=jnp.float32):
    """x: (B, C_in, T) f32.  params: torch-layout ConvBlock parameter dict.

    compute_dtype: matmul-input / input-DMA dtype (f32 or bf16; accumulation f32).
    tail_dtype   : dtype of the BN-FMA + GELU tail (bf16 halves VPU/EUP work on
                   v6e/v7x; keep f32 on v5e which has no bf16 VPU/EUP).
    out_dtype    : output-DMA dtype (bf16 halves writeback traffic).
    """
    B, C_in, T = x.shape
    C_out = params["w0"].shape[0]
    residual0 = (C_in == C_out)

    # Lane-dense blocks: pad T to a multiple of 128 (avoids masked vst.msk).
    T_pad = ((T + 127) // 128) * 128

    x_k = x.astype(compute_dtype)            # bf16 path: halve input DMA bytes
    if T_pad != T:
        x_k = jnp.pad(x_k, ((0, 0), (0, 0), (0, T_pad - T)))

    # (C_out, C_in, 3) -> (C_out, 3, C_in) -> (C_out, 3*C_in): tap-major columns
    # matching the kernel's [prev | center | next] sublane stack.
    w0_flat = jnp.transpose(params["w0"], (0, 2, 1)).reshape(C_out, 3 * C_in)
    w1_flat = jnp.transpose(params["w1"], (0, 2, 1)).reshape(C_out, 3 * C_out)
    w0_flat = w0_flat.astype(compute_dtype)
    w1_flat = w1_flat.astype(compute_dtype)

    # Fold BN (running stats) and the conv biases into one scale/shift pair each
    # (exact: the residual add happens before BN, which is affine).
    s0, t0 = _fold_batchnorm(params["bn0_gamma"], params["bn0_beta"],
                             params["bn0_mean"], params["bn0_var"])
    s1, t1 = _fold_batchnorm(params["bn1_gamma"], params["bn1_beta"],
                             params["bn1_mean"], params["bn1_var"])
    t0 = t0 + s0 * params["b0"]
    t1 = t1 + s1 * params["b1"]
    pcol = jnp.stack([s0, t0, s1, t1], axis=1).astype(jnp.float32)   # (C_out, 4)

    kernel = functools.partial(
        _conv_block_kernel, t_valid=T, residual0=residual0,
        compute_dtype=compute_dtype, tail_dtype=tail_dtype)

    def nbytes(n, dt):
        return int(n) * jnp.dtype(dt).itemsize

    in_block = nbytes(C_in * T_pad, x_k.dtype)
    out_block = nbytes(C_out * T_pad, out_dtype)
    w_bytes = (nbytes(w0_flat.size, compute_dtype)
               + nbytes(w1_flat.size, compute_dtype) + nbytes(pcol.size, jnp.float32))
    # VMEM budget: double-buffered activation blocks + (double-buffered) weights.
    vmem_need = 2 * (in_block + out_block) + 2 * w_bytes + (2 << 20)
    cparams = dict(dimension_semantics=("parallel",))
    if vmem_need > (16 << 20):    # above the smallest default scoped limit (v5e)
        cparams["vmem_limit_bytes"] = int(min(2 * vmem_need, 100 << 20))
    # TODO(synk): weights/pcol have constant index_maps and could be marked
    # pipeline_mode=pl.Buffered(1) to drop the redundant second VMEM copy at
    # large C; left default-buffered for lowering safety.

    flops = int(B * T * (2 * 3 * C_in * C_out + 2 * 3 * C_out * C_out)
                + 20 * B * C_out * T)
    transcendentals = int(2 * B * C_out * T)
    bytes_accessed = int(x_k.size * jnp.dtype(x_k.dtype).itemsize
                         + B * C_out * T_pad * jnp.dtype(out_dtype).itemsize
                         + w_bytes)

    out = pl.pallas_call(
        kernel,
        out_shape=jax.ShapeDtypeStruct((B, C_out, T_pad), out_dtype),
        grid_spec=pltpu.PrefetchScalarGridSpec(
            num_scalar_prefetch=0,
            grid=(B,),
            in_specs=[
                pl.BlockSpec((None, C_in, T_pad), lambda b: (b, 0, 0)),
                pl.BlockSpec((C_out, 3 * C_in), lambda b: (0, 0)),
                pl.BlockSpec((C_out, 3 * C_out), lambda b: (0, 0)),
                pl.BlockSpec((C_out, 4), lambda b: (0, 0)),
            ],
            out_specs=pl.BlockSpec((None, C_out, T_pad), lambda b: (b, 0, 0)),
        ),
        compiler_params=pltpu.CompilerParams(**cparams),
        cost_estimate=pl.CostEstimate(
            flops=flops, transcendentals=transcendentals,
            bytes_accessed=bytes_accessed),
    )(x_k, w0_flat, w1_flat, pcol)

    if T_pad != T:
        out = out[:, :, :T]
    return out


# ----------------------------- reference + demo ------------------------------

def reference_forward(x, params):
    """Pure-JAX mirror of ConvBlock.forward in eval mode (f32, HIGHEST precision)."""
    def conv1d_same(inp, w, b):
        y = lax.conv_general_dilated(
            inp, w, window_strides=(1,), padding="SAME",
            dimension_numbers=("NCH", "OIH", "NCH"),
            precision=lax.Precision.HIGHEST)
        return y + b[None, :, None]

    def bn_eval(inp, gamma, beta, mean, var):
        inv = lax.rsqrt(var + BN_EPS)
        return ((inp - mean[None, :, None]) * (gamma * inv)[None, :, None]
                + beta[None, :, None])

    c_in = x.shape[1]
    c_out = params["w0"].shape[0]
    h = conv1d_same(x, params["w0"], params["b0"])
    if c_in == c_out:
        h = h + x
    h = _gelu(bn_eval(h, params["bn0_gamma"], params["bn0_beta"],
                      params["bn0_mean"], params["bn0_var"]))
    h = conv1d_same(h, params["w1"], params["b1"]) + h
    h = _gelu(bn_eval(h, params["bn1_gamma"], params["bn1_beta"],
                      params["bn1_mean"], params["bn1_var"]))
    return h                                                 # dropout = identity


def make_params(key, c_in, c_out):
    ks = jax.random.split(key, 12)

    def rnd(k, shape, scale=0.1):
        return scale * jax.random.normal(k, shape, jnp.float32)

    return dict(
        w0=rnd(ks[0], (c_out, c_in, 3), 1.0 / math.sqrt(3 * c_in)),
        b0=rnd(ks[1], (c_out,)),
        w1=rnd(ks[2], (c_out, c_out, 3), 1.0 / math.sqrt(3 * c_out)),
        b1=rnd(ks[3], (c_out,)),
        bn0_gamma=1.0 + rnd(ks[4], (c_out,)),
        bn0_beta=rnd(ks[5], (c_out,)),
        bn0_mean=rnd(ks[6], (c_out,)),
        bn0_var=0.5 + jax.random.uniform(ks[7], (c_out,), jnp.float32),
        bn1_gamma=1.0 + rnd(ks[8], (c_out,)),
        bn1_beta=rnd(ks[9], (c_out,)),
        bn1_mean=rnd(ks[10], (c_out,)),
        bn1_var=0.5 + jax.random.uniform(ks[11], (c_out,), jnp.float32),
    )


def _rel_err(a, b):
    a = a.astype(jnp.float32)
    b = b.astype(jnp.float32)
    return jnp.linalg.norm(a - b) / jnp.linalg.norm(b)


if __name__ == "__main__":
    key = jax.random.PRNGKey(0)
    k1, k2, k3, k4, k5, k6 = jax.random.split(key, 6)

    # Case 1: in_dim == out_dim (conv0 residual active), all-f32.
    B, C, T = 4, 32, 256
    x1 = jax.random.normal(k1, (B, C, T), jnp.float32)
    p1 = make_params(k2, C, C)
    out1 = jax.block_until_ready(conv_block_pallas(x1, p1))
    ref1 = reference_forward(x1, p1)
    assert out1.shape == (B, C, T)
    assert float(_rel_err(out1, ref1)) < 5e-3, "case1 (f32, residual) mismatch"

    # Case 2: in_dim != out_dim (no conv0 residual); bf16 input/weight DMA,
    # bf16 elementwise tail (v6e/v7x-style), bf16 output DMA, f32 accumulation.
    Ci, Co = 16, 32
    x2 = jax.random.normal(k3, (B, Ci, T), jnp.float32)
    p2 = make_params(k4, Ci, Co)
    out2 = jax.block_until_ready(
        conv_block_pallas(x2, p2, compute_dtype=jnp.bfloat16,
                          tail_dtype=jnp.bfloat16, out_dtype=jnp.bfloat16))
    ref2 = reference_forward(x2, p2)
    assert out2.shape == (B, Co, T)
    assert out2.dtype == jnp.bfloat16
    assert float(_rel_err(out2, ref2)) < 3e-2, "case2 (bf16, channel-change) mismatch"

    # Case 3: T not a multiple of 128 -> exercises the lane-padding path.
    B3, C3, T3 = 2, 8, 200
    x3 = jax.random.normal(k5, (B3, C3, T3), jnp.float32)
    p3 = make_params(k6, C3, C3)
    out3 = jax.block_until_ready(conv_block_pallas(x3, p3))
    ref3 = reference_forward(x3, p3)
    assert out3.shape == (B3, C3, T3)
    assert float(_rel_err(out3, ref3)) < 5e-3, "case3 (padded T) mismatch"

    print("KERNEL_OK")
</pallas_src>

<mosaic_0001>
module attributes {stable_mosaic.version = 11 : i64} {
  func.func @_conv_block_kernel(%arg0: i32, %arg1: memref<1x32x256xf32, #tpu.memory_space<vmem>>, %arg2: memref<32x96xf32, #tpu.memory_space<vmem>>, %arg3: memref<32x96xf32, #tpu.memory_space<vmem>>, %arg4: memref<32x4xf32, #tpu.memory_space<vmem>>, %arg5: memref<1x32x256xf32, #tpu.memory_space<vmem>>) attributes {dimension_semantics = [#tpu.dimension_semantics<parallel>], iteration_bounds = array<i64: 4>, scalar_prefetch = 0 : i64, scratch_operands = 0 : i64, tpu.core_type = #tpu.core_type<tc>, window_params = [{transform_indices = @transform_0, window_bounds = array<i64: 1, 32, 256>}, {pipeline_mode = #tpu.pipeline_mode<synchronous>, transform_indices = @transform_1, window_bounds = array<i64: 32, 96>}, {pipeline_mode = #tpu.pipeline_mode<synchronous>, transform_indices = @transform_2, window_bounds = array<i64: 32, 96>}, {pipeline_mode = #tpu.pipeline_mode<synchronous>, transform_indices = @transform_3, window_bounds = array<i64: 32, 4>}, {transform_indices = @transform_4, window_bounds = array<i64: 1, 32, 256>}]} {
    %c0 = arith.constant 0 : index
    %c0_0 = arith.constant 0 : index
    %0 = vector.load %arg4[%c0, %c0_0] : memref<32x4xf32, #tpu.memory_space<vmem>>, vector<32x4xf32>
    %1 = vector.extract_strided_slice %0 {offsets = [0, 0], sizes = [32, 1], strides = [1, 1]} : vector<32x4xf32> to vector<32x1xf32>
    %2 = vector.extract_strided_slice %0 {offsets = [0, 1], sizes = [32, 1], strides = [1, 1]} : vector<32x4xf32> to vector<32x1xf32>
    %3 = vector.extract_strided_slice %0 {offsets = [0, 2], sizes = [32, 1], strides = [1, 1]} : vector<32x4xf32> to vector<32x1xf32>
    %4 = vector.extract_strided_slice %0 {offsets = [0, 3], sizes = [32, 1], strides = [1, 1]} : vector<32x4xf32> to vector<32x1xf32>
    %5 = tpu.iota {dimensions = array<i32: 1>} : vector<1x256xi32>
    %c0_i32 = arith.constant 0 : i32
    %6 = vector.broadcast %c0_i32 : i32 to vector<1x256xi32>
    %7 = arith.cmpi eq, %5, %6 : vector<1x256xi32>
    %c255_i32 = arith.constant 255 : i32
    %8 = vector.broadcast %c255_i32 : i32 to vector<1x256xi32>
    %9 = arith.cmpi eq, %5, %8 : vector<1x256xi32>
    %c0_1 = arith.constant 0 : index
    %c0_2 = arith.constant 0 : index
    %c0_3 = arith.constant 0 : index
    %10 = vector.load %arg1[%c0_1, %c0_2, %c0_3] : memref<1x32x256xf32, #tpu.memory_space<vmem>>, vector<1x32x256xf32>
    %11 = vector.shape_cast %10 : vector<1x32x256xf32> to vector<32x256xf32>
    %c0_4 = arith.constant 0 : index
    %c0_5 = arith.constant 0 : index
    %12 = vector.load %arg2[%c0_4, %c0_5] : memref<32x96xf32, #tpu.memory_space<vmem>>, vector<32x96xf32>
    %c1_i32 = arith.constant 1 : i32
    %13 = tpu.dynamic_rotate %11 by %c1_i32 dim 1 : vector<32x256xf32>, i32 -> vector<32x256xf32>
    %cst = arith.constant 0.000000e+00 : f32
    %14 = vector.shape_cast %7 : vector<1x256xi1> to vector<1x256xi1>
    %15 = vector.broadcast %14 : vector<1x256xi1> to vector<32x256xi1>
    %16 = vector.broadcast %cst : f32 to vector<32x256xf32>
    %17 = arith.select %15, %16, %13 : vector<32x256xi1>, vector<32x256xf32>
    %c255_i32_6 = arith.constant 255 : i32
    %18 = tpu.dynamic_rotate %11 by %c255_i32_6 dim 1 : vector<32x256xf32>, i32 -> vector<32x256xf32>
    %cst_7 = arith.constant 0.000000e+00 : f32
    %19 = vector.shape_cast %9 : vector<1x256xi1> to vector<1x256xi1>
    %20 = vector.broadcast %19 : vector<1x256xi1> to vector<32x256xi1>
    %21 = vector.broadcast %cst_7 : f32 to vector<32x256xf32>
    %22 = arith.select %20, %21, %18 : vector<32x256xi1>, vector<32x256xf32>
    %23 = tpu.concatenate %17, %11, %22 in 0 : vector<32x256xf32>, vector<32x256xf32>, vector<32x256xf32> -> vector<96x256xf32>
    %cst_8 = arith.constant dense<0.000000e+00> : vector<32x256xf32>
    %24 = tpu.matmul %12, %23, %cst_8 {dimension_numbers = #tpu.dot_dimension_numbers<[1], [0], [0], [1], [0, 0, 1, 1], [], []>} : vector<32x96xf32>, vector<96x256xf32>, vector<32x256xf32> -> vector<32x256xf32>
    %25 = arith.addf %24, %11 : vector<32x256xf32>
    %26 = vector.broadcast %1 : vector<32x1xf32> to vector<32x256xf32>
    %27 = arith.mulf %25, %26 : vector<32x256xf32>
    %28 = vector.broadcast %2 : vector<32x1xf32> to vector<32x256xf32>
    %29 = arith.addf %27, %28 : vector<32x256xf32>
    %cst_9 = arith.constant 5.000000e-01 : f32
    %30 = vector.broadcast %cst_9 : f32 to vector<32x256xf32>
    %31 = arith.mulf %30, %29 : vector<32x256xf32>
    %cst_10 = arith.constant 4.471500e-02 : f32
    %32 = vector.broadcast %cst_10 : f32 to vector<32x256xf32>
    %33 = arith.mulf %32, %29 : vector<32x256xf32>
    %34 = arith.mulf %33, %29 : vector<32x256xf32>
    %35 = arith.mulf %34, %29 : vector<32x256xf32>
    %36 = arith.addf %29, %35 : vector<32x256xf32>
    %cst_11 = arith.constant 0.797884583 : f32
    %37 = vector.broadcast %cst_11 : f32 to vector<32x256xf32>
    %38 = arith.mulf %37, %36 : vector<32x256xf32>
    %39 = math.tanh %38 : vector<32x256xf32>
    %cst_12 = arith.constant 1.000000e+00 : f32
    %40 = vector.broadcast %cst_12 : f32 to vector<32x256xf32>
    %41 = arith.addf %40, %39 : vector<32x256xf32>
    %42 = arith.mulf %31, %41 : vector<32x256xf32>
    %c0_13 = arith.constant 0 : index
    %c0_14 = arith.constant 0 : index
    %43 = vector.load %arg3[%c0_13, %c0_14] : memref<32x96xf32, #tpu.memory_space<vmem>>, vector<32x96xf32>
    %c1_i32_15 = arith.constant 1 : i32
    %44 = tpu.dynamic_rotate %42 by %c1_i32_15 dim 1 : vector<32x256xf32>, i32 -> vector<32x256xf32>
    %cst_16 = arith.constant 0.000000e+00 : f32
    %45 = vector.shape_cast %7 : vector<1x256xi1> to vector<1x256xi1>
    %46 = vector.broadcast %45 : vector<1x256xi1> to vector<32x256xi1>
    %47 = vector.broadcast %cst_16 : f32 to vector<32x256xf32>
    %48 = arith.select %46, %47, %44 : vector<32x256xi1>, vector<32x256xf32>
    %c255_i32_17 = arith.constant 255 : i32
    %49 = tpu.dynamic_rotate %42 by %c255_i32_17 dim 1 : vector<32x256xf32>, i32 -> vector<32x256xf32>
    %cst_18 = arith.constant 0.000000e+00 : f32
    %50 = vector.shape_cast %9 : vector<1x256xi1> to vector<1x256xi1>
    %51 = vector.broadcast %50 : vector<1x256xi1> to vector<32x256xi1>
    %52 = vector.broadcast %cst_18 : f32 to vector<32x256xf32>
    %53 = arith.select %51, %52, %49 : vector<32x256xi1>, vector<32x256xf32>
    %54 = tpu.concatenate %48, %42, %53 in 0 : vector<32x256xf32>, vector<32x256xf32>, vector<32x256xf32> -> vector<96x256xf32>
    %cst_19 = arith.constant dense<0.000000e+00> : vector<32x256xf32>
    %55 = tpu.matmul %43, %54, %cst_19 {dimension_numbers = #tpu.dot_dimension_numbers<[1], [0], [0], [1], [0, 0, 1, 1], [], []>} : vector<32x96xf32>, vector<96x256xf32>, vector<32x256xf32> -> vector<32x256xf32>
    %56 = arith.addf %55, %42 : vector<32x256xf32>
    %57 = vector.broadcast %3 : vector<32x1xf32> to vector<32x256xf32>
    %58 = arith.mulf %56, %57 : vector<32x256xf32>
    %59 = vector.broadcast %4 : vector<32x1xf32> to vector<32x256xf32>
    %60 = arith.addf %58, %59 : vector<32x256xf32>
    %cst_20 = arith.constant 5.000000e-01 : f32
    %61 = vector.broadcast %cst_20 : f32 to vector<32x256xf32>
    %62 = arith.mulf %61, %60 : vector<32x256xf32>
    %cst_21 = arith.constant 4.471500e-02 : f32
    %63 = vector.broadcast %cst_21 : f32 to vector<32x256xf32>
    %64 = arith.mulf %63, %60 : vector<32x256xf32>
    %65 = arith.mulf %64, %60 : vector<32x256xf32>
    %66 = arith.mulf %65, %60 : vector<32x256xf32>
    %67 = arith.addf %60, %66 : vector<32x256xf32>
    %cst_22 = arith.constant 0.797884583 : f32
    %68 = vector.broadcast %cst_22 : f32 to vector<32x256xf32>
    %69 = arith.mulf %68, %67 : vector<32x256xf32>
    %70 = math.tanh %69 : vector<32x256xf32>
    %cst_23 = arith.constant 1.000000e+00 : f32
    %71 = vector.broadcast %cst_23 : f32 to vector<32x256xf32>
    %72 = arith.addf %71, %70 : vector<32x256xf32>
    %73 = arith.mulf %62, %72 : vector<32x256xf32>
    %c0_24 = arith.constant 0 : index
    %c0_25 = arith.constant 0 : index
    %c0_26 = arith.constant 0 : index
    %74 = vector.load %arg5[%c0_24, %c0_25, %c0_26] : memref<1x32x256xf32, #tpu.memory_space<vmem>>, vector<1x32x256xf32>
    %75 = vector.shape_cast %74 : vector<1x32x256xf32> to vector<32x256xf32>
    %76 = vector.shape_cast %73 : vector<32x256xf32> to vector<1x32x256xf32>
    tpu.vector_store %arg5[%c0_24, %c0_25, %c0_26], %76 {strides = array<i32>} : memref<1x32x256xf32, #tpu.memory_space<vmem>>, vector<1x32x256xf32>,
    return
  }
  func.func @transform_0(%arg0: i32) -> (i32, i32, i32) {
    %c0_i32 = arith.constant 0 : i32
    %c0_i32_0 = arith.constant 0 : i32
    %c0_i32_1 = arith.constant 0 : i32
    return %arg0, %c0_i32, %c0_i32_0 : i32, i32, i32
  }
  func.func @transform_1(%arg0: i32) -> (i32, i32) {
    %c0_i32 = arith.constant 0 : i32
    %c0_i32_0 = arith.constant 0 : i32
    %c0_i32_1 = arith.constant 0 : i32
    return %c0_i32, %c0_i32_0 : i32, i32
  }
  func.func @transform_2(%arg0: i32) -> (i32, i32) {
    %c0_i32 = arith.constant 0 : i32
    %c0_i32_0 = arith.constant 0 : i32
    %c0_i32_1 = arith.constant 0 : i32
    return %c0_i32, %c0_i32_0 : i32, i32
  }
  func.func @transform_3(%arg0: i32) -> (i32, i32) {
    %c0_i32 = arith.constant 0 : i32
    %c0_i32_0 = arith.constant 0 : i32
    %c0_i32_1 = arith.constant 0 : i32
    return %c0_i32, %c0_i32_0 : i32, i32
  }
  func.func @transform_4(%arg0: i32) -> (i32, i32, i32) {
    %c0_i32 = arith.constant 0 : i32
    %c0_i32_0 = arith.constant 0 : i32
    %c0_i32_1 = arith.constant 0 : i32
    return %arg0, %c0_i32, %c0_i32_0 : i32, i32, i32
  }
}

</mosaic_0001>

<llo_original>
// kernel: tpu_custom_call.1
$region0: #{tpu_custom_call.1}
  #allocation0 [shape = 'u32[]', space=smem, size = 0x4, offset = 0x4, fixed_abs, tag = 'smem constant byte address 0x4 - core index']
  #allocation1 [shape = 'u32[144,128]{1,0:T(1,128)}', space=vmem, size = 0x12000, scoped, tag = 'internal scratch']
  %s0 = inlined_call_operand.hbm [shape: f32[4,32,256], index: 0, kind: input, shape index: {}]
  %s1 = inlined_call_operand.vmem [shape: f32[32,96], index: 1, kind: input, shape index: {}]
  %s2 = inlined_call_operand.hbm [shape: f32[32,96], index: 2, kind: input, shape index: {}]
  %s3 = inlined_call_operand.vmem [shape: f32[32,4], index: 3, kind: input, shape index: {}]
  %s4 = inlined_call_operand.hbm [shape: f32[4,32,256], index: 4, kind: output, shape index: {}]
  %s5 = sld [smem:[#allocation0]]
  $region57: #{tpu_custom_call.1} parent=0
    _
  %s7 = ssub.s32 1, %s5
  %s8 = scalar_select 0, %s7, %s5
  $region1: #{tpu_custom_call.1} parent=0
    #allocation2 [shape = 'u8[65536]{0}', space=vmem, size = 0x10000, scoped, tag = 'input window, operand 0']
    #allocation3 [shape = 's32[2]{0}', space=sflag, size = 0x8, scoped, tag = 'scoped memory for tpu_custom_call.1']
    #allocation4 [shape = 's32[2]{0}', space=sflag, size = 0x8, scoped, tag = 'scoped memory for tpu_custom_call.1']
    #allocation5 [shape = 'u8[16384]{0}', space=vmem, size = 0x4000, scoped, tag = 'input window, operand 2, single buffered']
    #allocation6 [shape = 's32[1]{0}', space=sflag, size = 0x4, scoped, tag = 'scoped memory for tpu_custom_call.1']
    #allocation7 [shape = 'u8[65536]{0}', space=vmem, size = 0x10000, scoped, tag = 'output window, operand 0']
    %9 = vsyncpa [#allocation3], 0
    %s10 = scalar_lea.sflag [#allocation3], 1
    %11 = vsyncpa %s10, 0
    %12 = vsyncpa [#allocation6], 0
    %13 = vsyncpa [#allocation4], 0
    %s14 = scalar_lea.sflag [#allocation4], 1
    %15 = vsyncpa %s14, 0
    loop: start=0, step=1, limit=6
    $region2: #{tpu_custom_call.1} parent=1 // loop_pre_header
      _
    $region3: #{tpu_custom_call.1} parent=1 // loop_header
      %s17 = sphi 0, %s21
      %p18 = scmp.ge.s32.totalorder %s17, 6
      %s27 = sphi 0, %s29
      %s30 = sphi 0, %s27
      %s31 = sphi 0, %s30
      %s47 = sphi 0, %s31
      %s51 = sphi 0, %s51
      %s53 = sphi 0, %s51
      %s54 = sphi 0, %s53
      %s68 = sphi 0, %s54
      %s72 = sphi 0, %s72
      %s74 = sphi 0, %s72
      %s75 = sphi 0, %s74
      %s89 = sphi 0, %s75
      %s93 = sphi 0, %s93
      %s95 = sphi 0, %s93
      %s96 = sphi 0, %s95
      %s110 = sphi 0, %s96
      %s116 = sphi 0, %s118
      %s119 = sphi 0, %s116
      %s120 = sphi 0, %s119
      %s136 = sphi 0, %s120
    $region4: #{tpu_custom_call.1} parent=1 // loop_header_branch
      %20 = sbr.rel (%p18) target = $region8
    $region5: #{tpu_custom_call.1} parent=1 // loop_body
      %s22 = ssub.s32 %s17, 1
      %s23 = ssub.s32 %s17, 2
      %s24 = sadd.s32 %s17, 1
      %s25 = ssub.s32 %s17, %s24
      %p26 = scmp.eq.s32.totalorder %s25, 0
      %s28 = sadd.s32 %s27, 1
      %s29 = scalar_select %p26, %s27, %s28
      %p32 = pneg %p26
      %p33 = scmp.eq.s32.totalorder %s17, 3
      %p34 = por %p32, %p33
      %p35 = scmp.ne.s32.totalorder %s27, %s30
      %p36 = scmp.eq.s32.totalorder %s17, 0
      %p37 = por %p35, %p36
      %p38 = scmp.ne.s32.totalorder %s27, %s30
      %p39 = scmp.eq.s32.totalorder %s22, 3
      %p40 = por %p38, %p39
      %p41 = scmp.ne.s32.totalorder %s30, %s31
      %p42 = scmp.eq.s32.totalorder %s22, 0
      %p43 = por %p41, %p42
      %p44 = scmp.ne.s32.totalorder %s30, %s31
      %p45 = scmp.eq.s32.totalorder %s23, 3
      %p46 = por %p44, %p45
      %p48 = scmp.ne.s32.totalorder %s31, %s47
      %p49 = scmp.eq.s32.totalorder %s23, 0
      %p50 = por %p48, %p49
      %s52 = sadd.s32 %s51, 1
      %p55 = scmp.eq.s32.totalorder %s17, 3
      %p56 = scmp.ne.s32.totalorder %s51, %s53
      %p57 = scmp.eq.s32.totalorder %s17, 0
      %p58 = por %p56, %p57
      %p59 = scmp.ne.s32.totalorder %s51, %s53
      %p60 = scmp.eq.s32.totalorder %s22, 3
      %p61 = por %p59, %p60
      %p62 = scmp.ne.s32.totalorder %s53, %s54
      %p63 = scmp.eq.s32.totalorder %s22, 0
      %p64 = por %p62, %p63
      %p65 = scmp.ne.s32.totalorder %s53, %s54
      %p66 = scmp.eq.s32.totalorder %s23, 3
      %p67 = por %p65, %p66
      %p69 = scmp.ne.s32.totalorder %s54, %s68
      %p70 = scmp.eq.s32.totalorder %s23, 0
      %p71 = por %p69, %p70
      %s73 = sadd.s32 %s72, 1
      %p76 = scmp.eq.s32.totalorder %s17, 3
      %p77 = scmp.ne.s32.totalorder %s72, %s74
      %p78 = scmp.eq.s32.totalorder %s17, 0
      %p79 = por %p77, %p78
      %p80 = scmp.ne.s32.totalorder %s72, %s74
      %p81 = scmp.eq.s32.totalorder %s22, 3
      %p82 = por %p80, %p81
      %p83 = scmp.ne.s32.totalorder %s74, %s75
      %p84 = scmp.eq.s32.totalorder %s22, 0
      %p85 = por %p83, %p84
      %p86 = scmp.ne.s32.totalorder %s74, %s75
      %p87 = scmp.eq.s32.totalorder %s23, 3
      %p88 = por %p86, %p87
      %p90 = scmp.ne.s32.totalorder %s75, %s89
      %p91 = scmp.eq.s32.totalorder %s23, 0
      %p92 = por %p90, %p91
      %s94 = sadd.s32 %s93, 1
      %p97 = scmp.eq.s32.totalorder %s17, 3
      %p98 = scmp.ne.s32.totalorder %s93, %s95
      %p99 = scmp.eq.s32.totalorder %s17, 0
      %p100 = por %p98, %p99
      %p101 = scmp.ne.s32.totalorder %s93, %s95
      %p102 = scmp.eq.s32.totalorder %s22, 3
      %p103 = por %p101, %p102
      %p104 = scmp.ne.s32.totalorder %s95, %s96
      %p105 = scmp.eq.s32.totalorder %s22, 0
      %p106 = por %p104, %p105
      %p107 = scmp.ne.s32.totalorder %s95, %s96
      %p108 = scmp.eq.s32.totalorder %s23, 3
      %p109 = por %p107, %p108
      %p111 = scmp.ne.s32.totalorder %s96, %s110
      %p112 = scmp.eq.s32.totalorder %s23, 0
      %p113 = por %p111, %p112
      %s114 = ssub.s32 %s17, %s24
      %p115 = scmp.eq.s32.totalorder %s114, 0
      %s117 = sadd.s32 %s116, 1
      %s118 = scalar_select %p115, %s116, %s117
      %p121 = pneg %p115
      %p122 = scmp.eq.s32.totalorder %s17, 3
      %p123 = por %p121, %p122
      %p124 = scmp.ne.s32.totalorder %s116, %s119
      %p125 = scmp.eq.s32.totalorder %s17, 0
      %p126 = por %p124, %p125
      %p127 = scmp.ne.s32.totalorder %s116, %s119
      %p128 = scmp.eq.s32.totalorder %s22, 3
      %p129 = por %p127, %p128
      %p130 = scmp.ne.s32.totalorder %s119, %s120
      %p131 = scmp.eq.s32.totalorder %s22, 0
      %p132 = por %p130, %p131
      %p133 = scmp.ne.s32.totalorder %s119, %s120
      %p134 = scmp.eq.s32.totalorder %s23, 3
      %p135 = por %p133, %p134
      %p137 = scmp.ne.s32.totalorder %s120, %s136
      %p138 = scmp.eq.s32.totalorder %s23, 0
      %p139 = por %p137, %p138
      %p140 = scmp.le.s32.totalorder 1, %s17
      %p141 = scmp.lt.s32.totalorder %s17, 5
      %p142 = pnand %p140, %p141
      %p143 = pneg %p142
      // Predicated region
      $region9: #{tpu_custom_call.1} parent=5 // pred_check
        _
      $region10: #{tpu_custom_call.1} parent=5 // pred_check_branch
        %145 = sbr.rel (%p142) target = $region12
      $region11: #{tpu_custom_call.1} parent=5 // pred_region
        %s146 = ssub.s32 %s17, 1
        // Predicated region
        $region13: #{tpu_custom_call.1} parent=11 // pred_check
          %p147 = pneg %p64
        $region14: #{tpu_custom_call.1} parent=11 // pred_check_branch
          %149 = sbr.rel (%p147) target = $region16
        $region15: #{tpu_custom_call.1} parent=11 // pred_region
          _
        $region16: #{tpu_custom_call.1} parent=11 // pred_fallthru
          _
        // Predicated region
        $region17: #{tpu_custom_call.1} parent=11 // pred_check
          %p150 = pneg %p85
        $region18: #{tpu_custom_call.1} parent=11 // pred_check_branch
          %152 = sbr.rel (%p150) target = $region20
        $region19: #{tpu_custom_call.1} parent=11 // pred_region
          %s154 = ssub.s32 512, 512
          %155 = vsyncadd [#allocation6], %s154
          %s156 = sshll.u32 [#allocation5], 4
          %s157 = int_to_ptr.vmem [resolvable:$true] %s156
          %162 = dma.hbm_to_vmem [thread:$0]  %s2, 512, %s157, [#allocation6], 128, 128, 8
        $region20: #{tpu_custom_call.1} parent=11 // pred_fallthru
          _
        // Predicated region
        $region21: #{tpu_custom_call.1} parent=11 // pred_check
          %p163 = pneg %p106
        $region22: #{tpu_custom_call.1} parent=11 // pred_check_branch
          %165 = sbr.rel (%p163) target = $region24
        $region23: #{tpu_custom_call.1} parent=11 // pred_region
          _
        $region24: #{tpu_custom_call.1} parent=11 // pred_fallthru
          _
      $region12: #{tpu_custom_call.1} parent=5 // pred_fallthru
        _
      %p166 = scmp.lt.s32.totalorder %s17, 4
      // Predicated region
      $region25: #{tpu_custom_call.1} parent=5 // pred_check
        %p167 = pneg %p166
      $region26: #{tpu_custom_call.1} parent=5 // pred_check_branch
        %169 = sbr.rel (%p167) target = $region28
      $region27: #{tpu_custom_call.1} parent=5 // pred_region
        // Predicated region
        $region29: #{tpu_custom_call.1} parent=27 // pred_check
          %p170 = pneg %p37
        $region30: #{tpu_custom_call.1} parent=27 // pred_check_branch
          %172 = sbr.rel (%p170) target = $region32
        $region31: #{tpu_custom_call.1} parent=27 // pred_region
          %s173 = sand.u32 %s27, 1
          %s174 = scalar_lea.sflag [#allocation3], %s173
          %s175 = sand.u32 %s27, 1
          %s176 = smul.addr %s175, 64
          %s177 = scalar_lea.vmem [#allocation2], %s176
          %s179 = ssub.s32 1024, 1024
          %180 = vsyncadd %s174, %s179
          %s181 = smul.addr %s17, 8
          %s182 = smul.addr %s181, 128
          %s183 = scalar_lea.hbm %s0, %s182
          %s184 = sshll.u32 %s177, 4
          %s185 = int_to_ptr.vmem [resolvable:$true] %s184
          %190 = dma.hbm_to_vmem [thread:$0]  %s183, 1024, %s185, %s174, 256, 256, 16
        $region32: #{tpu_custom_call.1} parent=27 // pred_fallthru
          _
      $region28: #{tpu_custom_call.1} parent=5 // pred_fallthru
        _
      %p191 = scmp.le.s32.totalorder 1, %s17
      %p192 = scmp.lt.s32.totalorder %s17, 5
      %p193 = pnand %p191, %p192
      %p194 = pneg %p193
      // Predicated region
      $region33: #{tpu_custom_call.1} parent=5 // pred_check
        _
      $region34: #{tpu_custom_call.1} parent=5 // pred_check_branch
        %196 = sbr.rel (%p193) target = $region36
      $region35: #{tpu_custom_call.1} parent=5 // pred_region
        %s197 = ssub.s32 %s17, 1
        %s198 = sand.u32 %s30, 1
        %s199 = scalar_lea.sflag [#allocation3], %s198
        %s200 = sand.u32 %s30, 1
        %s201 = smul.addr %s200, 64
        %s202 = scalar_lea.vmem [#allocation2], %s201
        // Predicated region
        $region37: #{tpu_custom_call.1} parent=35 // pred_check
          %p203 = pneg %p43
        $region38: #{tpu_custom_call.1} parent=35 // pred_check_branch
          %205 = sbr.rel (%p203) target = $region40
        $region39: #{tpu_custom_call.1} parent=35 // pred_region
          %206 = dma.done %s199, 1024
        $region40: #{tpu_custom_call.1} parent=35 // pred_fallthru
          _
        // Predicated region
        $region41: #{tpu_custom_call.1} parent=35 // pred_check
          %p207 = pneg %p85
        $region42: #{tpu_custom_call.1} parent=35 // pred_check_branch
          %209 = sbr.rel (%p207) target = $region44
        $region43: #{tpu_custom_call.1} parent=35 // pred_region
          %210 = dma.done [#allocation6], 512
        $region44: #{tpu_custom_call.1} parent=35 // pred_fallthru
          _
        %s211 = sand.u32 %s30, 1
        %s212 = scalar_lea.sflag [#allocation3], %s211
        %s213 = sand.u32 %s30, 1
        %s214 = smul.addr %s213, 64
        %s215 = scalar_lea.vmem [#allocation2], %s214
        %p216 = pneg %p43
        %p217 = pneg %p40
        %p218 = pneg %p64
        %p219 = pneg %p61
        %p220 = pneg %p85
        %p221 = pneg %p82
        %p222 = pneg %p106
        %p223 = pneg %p103
        %p224 = pneg %p132
        %p225 = pneg %p129
        %s226 = sand.u32 %s119, 1
        %s227 = scalar_lea.sflag [#allocation4], %s226
        %s228 = sand.u32 %s119, 1
        %s229 = smul.addr %s228, 64
        %s230 = scalar_lea.vmem [#allocation7], %s229
        %v231 = vld [vmem:[%s3] sm:$0xff]
        %v232 = vld [vmem:[%s3 + $0x8] sm:$0xff]
        %v233 = vld [vmem:[%s3 + $0x10] sm:$0xff]
        %v234 = vld [vmem:[%s3 + $0x18] sm:$0xff]
        %v235 = vlaneseq
        %v236 = vand.u32 %v235, 127
        %v237 = vadd.s32 %v236, 128
        %vm238 = vcmp.eq.s32.totalorder %v236, 0
        %vm239 = vcmp.eq.s32.totalorder %v237, 0
        %vm240 = vcmp.eq.s32.totalorder %v236, 255
        %vm241 = vcmp.eq.s32.totalorder %v237, 255
        %v242 = vld [vmem:[%s202] sm:$0xff]
        %v243 = vld [vmem:[%s202 + $0x8] sm:$0xff]
        %v244 = vld [vmem:[%s202 + $0x10] sm:$0xff]
        %v245 = vld [vmem:[%s202 + $0x18] sm:$0xff]
        %v246 = vld [vmem:[%s202 + $0x20] sm:$0xff]
        %v247 = vld [vmem:[%s202 + $0x28] sm:$0xff]
        %v248 = vld [vmem:[%s202 + $0x30] sm:$0xff]
        %v249 = vld [vmem:[%s202 + $0x38] sm:$0xff]
        %v250 = vld [vmem:[%s1] sm:$0xff]
        %v251 = vld [vmem:[%s1 + $0x8] sm:$0xff]
        %v252 = vld [vmem:[%s1 + $0x10] sm:$0xff]
        %v253 = vld [vmem:[%s1 + $0x18] sm:$0xff]
        %254 = vrot.lane.b32.xlu0 %v242, 1
        %v255 = vpop.permute.xlu0 %254
        %256 = vrot.lane.b32.xlu0 %v244, 1
        %v257 = vpop.permute.xlu0 %256
        %258 = vrot.lane.b32.xlu0 %v246, 1
        %v259 = vpop.permute.xlu0 %258
        %260 = vrot.lane.b32.xlu0 %v248, 1
        %v261 = vpop.permute.xlu0 %260
        %262 = vrot.lane.b32.xlu0 %v243, 1
        %v263 = vpop.permute.xlu0 %262
        %264 = vrot.lane.b32.xlu0 %v245, 1
        %v265 = vpop.permute.xlu0 %264
        %266 = vrot.lane.b32.xlu0 %v247, 1
        %v267 = vpop.permute.xlu0 %266
        %268 = vrot.lane.b32.xlu0 %v249, 1
        %v269 = vpop.permute.xlu0 %268
        %vm270 = vcmp.lt.s32.totalorder %v236, 1
        %v271 = vsel %vm270, %v255, %v263
        %v272 = vsel %vm270, %v257, %v265
        %v273 = vsel %vm270, %v259, %v267
        %v274 = vsel %vm270, %v261, %v269
        %v275 = vsel %vm270, %v263, %v255
        %v276 = vsel %vm270, %v265, %v257
        %v277 = vsel %vm270, %v267, %v259
        %v278 = vsel %vm270, %v269, %v261
        %v279 = vsel %vm238, 1, 0
        %v280 = vsel %vm239, 1, 0
        %vm281 = vcmp.eq.s32.totalorder %v279, 1
        %vm282 = vcmp.eq.s32.totalorder %v280, 1
        %v283 = vsel %vm281, 0.0, %v275
        %v284 = vsel %vm282, 0.0, %v271
        %v285 = vsel %vm281, 0.0, %v276
        %v286 = vsel %vm282, 0.0, %v272
        %v287 = vsel %vm281, 0.0, %v277
        %v288 = vsel %vm282, 0.0, %v273
        %v289 = vsel %vm281, 0.0, %v278
        %v290 = vsel %vm282, 0.0, %v274
        %291 = vrot.lane.b32.xlu0 %v242, 127
        %v292 = vpop.permute.xlu0 %291
        %293 = vrot.lane.b32.xlu0 %v244, 127
        %v294 = vpop.permute.xlu0 %293
        %295 = vrot.lane.b32.xlu0 %v246, 127
        %v296 = vpop.permute.xlu0 %295
        %297 = vrot.lane.b32.xlu0 %v248, 127
        %v298 = vpop.permute.xlu0 %297
        %299 = vrot.lane.b32.xlu0 %v243, 127
        %v300 = vpop.permute.xlu0 %299
        %301 = vrot.lane.b32.xlu0 %v245, 127
        %v302 = vpop.permute.xlu0 %301
        %303 = vrot.lane.b32.xlu0 %v247, 127
        %v304 = vpop.permute.xlu0 %303
        %305 = vrot.lane.b32.xlu0 %v249, 127
        %v306 = vpop.permute.xlu0 %305
        %vm307 = vcmp.lt.s32.totalorder %v236, 127
        %v308 = vsel %vm307, %v292, %v300
        %v309 = vsel %vm307, %v294, %v302
        %v310 = vsel %vm307, %v296, %v304
        %v311 = vsel %vm307, %v298, %v306
        %v312 = vsel %vm307, %v300, %v292
        %v313 = vsel %vm307, %v302, %v294
        %v314 = vsel %vm307, %v304, %v296
        %v315 = vsel %vm307, %v306, %v298
        %v316 = vsel %vm240, 1, 0
        %v317 = vsel %vm241, 1, 0
        %vm318 = vcmp.eq.s32.totalorder %v316, 1
        %vm319 = vcmp.eq.s32.totalorder %v317, 1
        %v320 = vsel %vm318, 0.0, %v308
        %v321 = vsel %vm319, 0.0, %v312
        %v322 = vsel %vm318, 0.0, %v309
        %v323 = vsel %vm319, 0.0, %v313
        %v324 = vsel %vm318, 0.0, %v310
        %v325 = vsel %vm319, 0.0, %v314
        %v326 = vsel %vm318, 0.0, %v311
        %v327 = vsel %vm319, 0.0, %v315
        %vm328 = vcmask 785408
        %v330 = vsel %vm328, %v250, 0
        %v333 = vsel %vm328, %v251, 0
        %v336 = vsel %vm328, %v252, 0
        %v339 = vsel %vm328, %v253, 0
        %341 = vmatprep.subr.mxu0 %v284
        %342 = vmatpush1.msra.mxu0 %v283
        %343 = vmatprep.subr.mxu0 %v286
        %344 = vmatpush1.msra.mxu0 %v285
        %345 = vmatprep.subr.mxu0 %v288
        %346 = vmatpush1.msra.mxu0 %v287
        %347 = vmatprep.subr.mxu0 %v290
        %348 = vmatpush1.msra.mxu0 %v289
        %349 = vmatprep.subr.mxu0 %v243
        %350 = vmatpush1.msra.mxu0 %v242
        %351 = vmatprep.subr.mxu0 %v245
        %352 = vmatpush1.msra.mxu0 %v244
        %353 = vmatprep.subr.mxu0 %v247
        %354 = vmatpush1.msra.mxu0 %v246
        %355 = vmatprep.subr.mxu0 %v249
        %356 = vmatpush1.msra.mxu0 %v248
        %357 = vmatprep.subr.mxu0 %v321
        %358 = vmatpush1.msra.mxu0 %v320
        %359 = vmatprep.subr.mxu0 %v323
        %360 = vmatpush1.msra.mxu0 %v322
        %361 = vmatprep.subr.mxu0 %v325
        %362 = vmatpush1.msra.mxu0 %v324
        %363 = vmatprep.subr.mxu0 %v327
        %364 = vmatpush1.msra.mxu0 %v326
        %365 = vmatprep.subr.mxu0 0.0
        %366 = vmatpush1.msra.mxu0 0.0
        %367 = vmatprep.subr.mxu0 0.0
        %368 = vmatpush1.msra.mxu0 0.0
        %369 = vmatprep.subr.mxu0 0.0
        %370 = vmatpush1.msra.mxu0 0.0
        %371 = vmatprep.subr.mxu0 0.0
        %372 = vmatpush1.msra.mxu0 0.0
        %373 = vmatprep.subr.mxu0 0.0
        %374 = vmatpush1.msra.mxu0 0.0
        %375 = vmatprep.subr.mxu0 0.0
        %376 = vmatpush1.msra.mxu0 0.0
        %377 = vmatprep.subr.mxu0 0.0
        %378 = vmatpush1.msra.mxu0 0.0
        %379 = vmatprep.subr.mxu0 0.0
        %380 = vmatpush1.msra.mxu0 0.0
        %381 = vmatprep.subr.mxu0 0.0
        %382 = vmatpush1.msra.mxu0 0.0
        %383 = vmatprep.subr.mxu0 0.0
        %384 = vmatpush1.msra.mxu0 0.0
        %385 = vmatprep.subr.mxu0 0.0
        %386 = vmatpush1.msra.mxu0 0.0
        %387 = vmatprep.subr.mxu0 0.0
        %388 = vmatpush1.msra.mxu0 0.0
        %389 = vmatprep.subr.mxu0 0.0
        %390 = vmatpush1.msra.mxu0 0.0
        %391 = vmatprep.subr.mxu0 0.0
        %392 = vmatpush1.msra.mxu0 0.0
        %393 = vmatprep.subr.mxu0 0.0
        %394 = vmatpush1.msra.mxu0 0.0
        %395 = vmatprep.subr.mxu0 0.0
        %396 = vmatpush1.msra.mxu0 0.0
        %397 = vmatprep.subr.mxu0 0.0
        %398 = vmatpush1.msra.mxu0 0.0
        %399 = vmatprep.subr.mxu0 0.0
        %400 = vmatpush1.msra.mxu0 0.0
        %401 = vmatprep.subr.mxu0 0.0
        %402 = vmatpush1.msra.mxu0 0.0
        %403 = vmatprep.subr.mxu0 0.0
        %404 = vmatpush1.msra.mxu0 0.0
        %405 = vmatprep.mubr.f32.mxu0 0.0
        %406 = vmatmul.mubr.f32.gmra.mrb[0].mxu0 %v330
        %v407 = vpop.f32.mrb[0].mxu0
        %v408 = vadd.f32 %v242, %v407
        %v409 = vpop.f32.mrb[0].mxu0
        %v410 = vadd.f32 %v243, %v409
        %411 = vmatprep.mubr.f32.mxu0 0.0
        %412 = vmatmul.mubr.f32.gmra.mrb[0].mxu0 %v333
        %v413 = vpop.f32.mrb[0].mxu0
        %v414 = vadd.f32 %v244, %v413
        %v415 = vpop.f32.mrb[0].mxu0
        %v416 = vadd.f32 %v245, %v415
        %417 = vmatprep.mubr.f32.mxu0 0.0
        %418 = vmatmul.mubr.f32.gmra.mrb[0].mxu0 %v336
        %v419 = vpop.f32.mrb[0].mxu0
        %v420 = vadd.f32 %v246, %v419
        %v421 = vpop.f32.mrb[0].mxu0
        %v422 = vadd.f32 %v247, %v421
        %423 = vmatprep.mubr.f32.mxu0 0.0
        %424 = vmatmul.mubr.f32.gmra.mrb[0].mxu0 %v339
        %v425 = vpop.f32.mrb[0].mxu0
        %v426 = vadd.f32 %v248, %v425
        %v427 = vpop.f32.mrb[0].mxu0
        %v428 = vadd.f32 %v249, %v427
        %429 = vdwg.mxu0
        %431 = vset.pattern.permute.xlu0 0
        %432 = vperm.xlu0 %431, %v231
        %v433 = vpop.permute.xlu0 %432
        %436 = vset.pattern.permute.xlu0 0
        %437 = vperm.xlu0 %436, %v232
        %v438 = vpop.permute.xlu0 %437
        %441 = vset.pattern.permute.xlu0 0
        %442 = vperm.xlu0 %441, %v233
        %v443 = vpop.permute.xlu0 %442
        %446 = vset.pattern.permute.xlu0 0
        %447 = vperm.xlu0 %446, %v234
        %v448 = vpop.permute.xlu0 %447
        %v450 = vmul.f32 %v408, %v433
        %v451 = vmul.f32 %v410, %v433
        %v452 = vmul.f32 %v414, %v438
        %v453 = vmul.f32 %v416, %v438
        %v454 = vmul.f32 %v420, %v443
        %v455 = vmul.f32 %v422, %v443
        %v456 = vmul.f32 %v426, %v448
        %v457 = vmul.f32 %v428, %v448
        %458 = vset.pattern.permute.xlu0 1
        %459 = vperm.xlu0 %458, %v231
        %v460 = vpop.permute.xlu0 %459
        %462 = vset.pattern.permute.xlu0 1
        %463 = vperm.xlu0 %462, %v232
        %v464 = vpop.permute.xlu0 %463
        %466 = vset.pattern.permute.xlu0 1
        %467 = vperm.xlu0 %466, %v233
        %v468 = vpop.permute.xlu0 %467
        %470 = vset.pattern.permute.xlu0 1
        %471 = vperm.xlu0 %470, %v234
        %v472 = vpop.permute.xlu0 %471
        %v474 = vadd.f32 %v450, %v460
        %v475 = vadd.f32 %v451, %v460
        %v476 = vadd.f32 %v452, %v464
        %v477 = vadd.f32 %v453, %v464
        %v478 = vadd.f32 %v454, %v468
        %v479 = vadd.f32 %v455, %v468
        %v480 = vadd.f32 %v456, %v472
        %v481 = vadd.f32 %v457, %v472
        %v482 = vmul.f32 %v474, 0.5
        %v483 = vmul.f32 %v475, 0.5
        %v484 = vmul.f32 %v476, 0.5
        %v485 = vmul.f32 %v477, 0.5
        %v486 = vmul.f32 %v478, 0.5
        %v487 = vmul.f32 %v479, 0.5
        %v488 = vmul.f32 %v480, 0.5
        %v489 = vmul.f32 %v481, 0.5
        %v490 = vmul.f32 %v474, 0.044715
        %v491 = vmul.f32 %v475, 0.044715
        %v492 = vmul.f32 %v476, 0.044715
        %v493 = vmul.f32 %v477, 0.044715
        %v494 = vmul.f32 %v478, 0.044715
        %v495 = vmul.f32 %v479, 0.044715
        %v496 = vmul.f32 %v480, 0.044715
        %v497 = vmul.f32 %v481, 0.044715
        %v498 = vmul.f32 %v490, %v474
        %v499 = vmul.f32 %v491, %v475
        %v500 = vmul.f32 %v492, %v476
        %v501 = vmul.f32 %v493, %v477
        %v502 = vmul.f32 %v494, %v478
        %v503 = vmul.f32 %v495, %v479
        %v504 = vmul.f32 %v496, %v480
        %v505 = vmul.f32 %v497, %v481
        %v506 = vmul.f32 %v498, %v474
        %v507 = vmul.f32 %v499, %v475
        %v508 = vmul.f32 %v500, %v476
        %v509 = vmul.f32 %v501, %v477
        %v510 = vmul.f32 %v502, %v478
        %v511 = vmul.f32 %v503, %v479
        %v512 = vmul.f32 %v504, %v480
        %v513 = vmul.f32 %v505, %v481
        %v514 = vadd.f32 %v474, %v506
        %v515 = vadd.f32 %v475, %v507
        %v516 = vadd.f32 %v476, %v508
        %v517 = vadd.f32 %v477, %v509
        %v518 = vadd.f32 %v478, %v510
        %v519 = vadd.f32 %v479, %v511
        %v520 = vadd.f32 %v480, %v512
        %v521 = vadd.f32 %v481, %v513
        %v522 = vmul.f32 %v514, 0.7978846
        %v523 = vmul.f32 %v515, 0.7978846
        %v524 = vmul.f32 %v516, 0.7978846
        %v525 = vmul.f32 %v517, 0.7978846
        %v526 = vmul.f32 %v518, 0.7978846
        %v527 = vmul.f32 %v519, 0.7978846
        %v528 = vmul.f32 %v520, 0.7978846
        %v529 = vmul.f32 %v521, 0.7978846
        %v530 = vtanh.pop %v522
        %v531 = vtanh.pop %v523
        %v532 = vtanh.pop %v524
        %v533 = vtanh.pop %v525
        %v534 = vtanh.pop %v526
        %v535 = vtanh.pop %v527
        %v536 = vtanh.pop %v528
        %v537 = vtanh.pop %v529
        %v538 = vadd.f32 %v530, 1.0
        %v539 = vadd.f32 %v531, 1.0
        %v540 = vadd.f32 %v532, 1.0
        %v541 = vadd.f32 %v533, 1.0
        %v542 = vadd.f32 %v534, 1.0
        %v543 = vadd.f32 %v535, 1.0
        %v544 = vadd.f32 %v536, 1.0
        %v545 = vadd.f32 %v537, 1.0
        %v546 = vmul.f32 %v482, %v538
        %v547 = vmul.f32 %v483, %v539
        %v548 = vmul.f32 %v484, %v540
        %v549 = vmul.f32 %v485, %v541
        %v550 = vmul.f32 %v486, %v542
        %v551 = vmul.f32 %v487, %v543
        %v552 = vmul.f32 %v488, %v544
        %v553 = vmul.f32 %v489, %v545
        %v554 = vld [vmem:[#allocation5] sm:$0xff]
        %v555 = vld [vmem:[#allocation5 + $0x8] sm:$0xff]
        %v556 = vld [vmem:[#allocation5 + $0x10] sm:$0xff]
        %v557 = vld [vmem:[#allocation5 + $0x18] sm:$0xff]
        %558 = vrot.lane.b32.xlu0 %v546, 1
        %v559 = vpop.permute.xlu0 %558
        %560 = vrot.lane.b32.xlu0 %v548, 1
        %v561 = vpop.permute.xlu0 %560
        %562 = vrot.lane.b32.xlu0 %v550, 1
        %v563 = vpop.permute.xlu0 %562
        %564 = vrot.lane.b32.xlu0 %v552, 1
        %v565 = vpop.permute.xlu0 %564
        %566 = vrot.lane.b32.xlu0 %v547, 1
        %v567 = vpop.permute.xlu0 %566
        %568 = vrot.lane.b32.xlu0 %v549, 1
        %v569 = vpop.permute.xlu0 %568
        %570 = vrot.lane.b32.xlu0 %v551, 1
        %v571 = vpop.permute.xlu0 %570
        %572 = vrot.lane.b32.xlu0 %v553, 1
        %v573 = vpop.permute.xlu0 %572
        %v574 = vsel %vm270, %v559, %v567
        %v575 = vsel %vm270, %v561, %v569
        %v576 = vsel %vm270, %v563, %v571
        %v577 = vsel %vm270, %v565, %v573
        %v578 = vsel %vm270, %v567, %v559
        %v579 = vsel %vm270, %v569, %v561
        %v580 = vsel %vm270, %v571, %v563
        %v581 = vsel %vm270, %v573, %v565
        %v582 = vsel %vm281, 0.0, %v578
        %v583 = vsel %vm282, 0.0, %v574
        %v584 = vsel %vm281, 0.0, %v579
        %v585 = vsel %vm282, 0.0, %v575
        %v586 = vsel %vm281, 0.0, %v580
        %v587 = vsel %vm282, 0.0, %v576
        %v588 = vsel %vm281, 0.0, %v581
        %v589 = vsel %vm282, 0.0, %v577
        %590 = vrot.lane.b32.xlu0 %v546, 127
        %v591 = vpop.permute.xlu0 %590
        %592 = vrot.lane.b32.xlu0 %v548, 127
        %v593 = vpop.permute.xlu0 %592
        %594 = vrot.lane.b32.xlu0 %v550, 127
        %v595 = vpop.permute.xlu0 %594
        %596 = vrot.lane.b32.xlu0 %v552, 127
        %v597 = vpop.permute.xlu0 %596
        %598 = vrot.lane.b32.xlu0 %v547, 127
        %v599 = vpop.permute.xlu0 %598
        %600 = vrot.lane.b32.xlu0 %v549, 127
        %v601 = vpop.permute.xlu0 %600
        %602 = vrot.lane.b32.xlu0 %v551, 127
        %v603 = vpop.permute.xlu0 %602
        %604 = vrot.lane.b32.xlu0 %v553, 127
        %v605 = vpop.permute.xlu0 %604
        %v606 = vsel %vm307, %v591, %v599
        %v607 = vsel %vm307, %v593, %v601
        %v608 = vsel %vm307, %v595, %v603
        %v609 = vsel %vm307, %v597, %v605
        %v610 = vsel %vm307, %v599, %v591
        %v611 = vsel %vm307, %v601, %v593
        %v612 = vsel %vm307, %v603, %v595
        %v613 = vsel %vm307, %v605, %v597
        %v614 = vsel %vm318, 0.0, %v606
        %v615 = vsel %vm319, 0.0, %v610
        %v616 = vsel %vm318, 0.0, %v607
        %v617 = vsel %vm319, 0.0, %v611
        %v618 = vsel %vm318, 0.0, %v608
        %v619 = vsel %vm319, 0.0, %v612
        %v620 = vsel %vm318, 0.0, %v609
        %v621 = vsel %vm319, 0.0, %v613
        %v623 = vsel %vm328, %v554, 0
        %v626 = vsel %vm328, %v555, 0
        %v629 = vsel %vm328, %v556, 0
        %v632 = vsel %vm328, %v557, 0
        %634 = vmatprep.subr.mxu0 %v583
        %635 = vmatpush1.msra.mxu0 %v582
        %636 = vmatprep.subr.mxu0 %v585
        %637 = vmatpush1.msra.mxu0 %v584
        %638 = vmatprep.subr.mxu0 %v587
        %639 = vmatpush1.msra.mxu0 %v586
        %640 = vmatprep.subr.mxu0 %v589
        %641 = vmatpush1.msra.mxu0 %v588
        %642 = vmatprep.subr.mxu0 %v547
        %643 = vmatpush1.msra.mxu0 %v546
        %644 = vmatprep.subr.mxu0 %v549
        %645 = vmatpush1.msra.mxu0 %v548
        %646 = vmatprep.subr.mxu0 %v551
        %647 = vmatpush1.msra.mxu0 %v550
        %648 = vmatprep.subr.mxu0 %v553
        %649 = vmatpush1.msra.mxu0 %v552
        %650 = vmatprep.subr.mxu0 %v615
        %651 = vmatpush1.msra.mxu0 %v614
        %652 = vmatprep.subr.mxu0 %v617
        %653 = vmatpush1.msra.mxu0 %v616
        %654 = vmatprep.subr.mxu0 %v619
        %655 = vmatpush1.msra.mxu0 %v618
        %656 = vmatprep.subr.mxu0 %v621
        %657 = vmatpush1.msra.mxu0 %v620
        %658 = vmatprep.subr.mxu0 0.0
        %659 = vmatpush1.msra.mxu0 0.0
        %660 = vmatprep.subr.mxu0 0.0
        %661 = vmatpush1.msra.mxu0 0.0
        %662 = vmatprep.subr.mxu0 0.0
        %663 = vmatpush1.msra.mxu0 0.0
        %664 = vmatprep.subr.mxu0 0.0
        %665 = vmatpush1.msra.mxu0 0.0
        %666 = vmatprep.subr.mxu0 0.0
        %667 = vmatpush1.msra.mxu0 0.0
        %668 = vmatprep.subr.mxu0 0.0
        %669 = vmatpush1.msra.mxu0 0.0
        %670 = vmatprep.subr.mxu0 0.0
        %671 = vmatpush1.msra.mxu0 0.0
        %672 = vmatprep.subr.mxu0 0.0
        %673 = vmatpush1.msra.mxu0 0.0
        %674 = vmatprep.subr.mxu0 0.0
        %675 = vmatpush1.msra.mxu0 0.0
        %676 = vmatprep.subr.mxu0 0.0
        %677 = vmatpush1.msra.mxu0 0.0
        %678 = vmatprep.subr.mxu0 0.0
        %679 = vmatpush1.msra.mxu0 0.0
        %680 = vmatprep.subr.mxu0 0.0
        %681 = vmatpush1.msra.mxu0 0.0
        %682 = vmatprep.subr.mxu0 0.0
        %683 = vmatpush1.msra.mxu0 0.0
        %684 = vmatprep.subr.mxu0 0.0
        %685 = vmatpush1.msra.mxu0 0.0
        %686 = vmatprep.subr.mxu0 0.0
        %687 = vmatpush1.msra.mxu0 0.0
        %688 = vmatprep.subr.mxu0 0.0
        %689 = vmatpush1.msra.mxu0 0.0
        %690 = vmatprep.subr.mxu0 0.0
        %691 = vmatpush1.msra.mxu0 0.0
        %692 = vmatprep.subr.mxu0 0.0
        %693 = vmatpush1.msra.mxu0 0.0
        %694 = vmatprep.subr.mxu0 0.0
        %695 = vmatpush1.msra.mxu0 0.0
        %696 = vmatprep.subr.mxu0 0.0
        %697 = vmatpush1.msra.mxu0 0.0
        %698 = vmatprep.mubr.f32.mxu0 0.0
        %699 = vmatmul.mubr.f32.gmra.mrb[0].mxu0 %v623
        %v700 = vpop.f32.mrb[0].mxu0
        %v701 = vadd.f32 %v546, %v700
        %v702 = vpop.f32.mrb[0].mxu0
        %v703 = vadd.f32 %v547, %v702
        %704 = vmatprep.mubr.f32.mxu0 0.0
        %705 = vmatmul.mubr.f32.gmra.mrb[0].mxu0 %v626
        %v706 = vpop.f32.mrb[0].mxu0
        %v707 = vadd.f32 %v548, %v706
        %v708 = vpop.f32.mrb[0].mxu0
        %v709 = vadd.f32 %v549, %v708
        %710 = vmatprep.mubr.f32.mxu0 0.0
        %711 = vmatmul.mubr.f32.gmra.mrb[0].mxu0 %v629
        %v712 = vpop.f32.mrb[0].mxu0
        %v713 = vadd.f32 %v550, %v712
        %v714 = vpop.f32.mrb[0].mxu0
        %v715 = vadd.f32 %v551, %v714
        %716 = vmatprep.mubr.f32.mxu0 0.0
        %717 = vmatmul.mubr.f32.gmra.mrb[0].mxu0 %v632
        %v718 = vpop.f32.mrb[0].mxu0
        %v719 = vadd.f32 %v552, %v718
        %v720 = vpop.f32.mrb[0].mxu0
        %v721 = vadd.f32 %v553, %v720
        %722 = vdwg.mxu0
        %723 = vset.pattern.permute.xlu0 2
        %724 = vperm.xlu0 %723, %v231
        %v725 = vpop.permute.xlu0 %724
        %727 = vset.pattern.permute.xlu0 2
        %728 = vperm.xlu0 %727, %v232
        %v729 = vpop.permute.xlu0 %728
        %731 = vset.pattern.permute.xlu0 2
        %732 = vperm.xlu0 %731, %v233
        %v733 = vpop.permute.xlu0 %732
        %735 = vset.pattern.permute.xlu0 2
        %736 = vperm.xlu0 %735, %v234
        %v737 = vpop.permute.xlu0 %736
        %v739 = vmul.f32 %v701, %v725
        %v740 = vmul.f32 %v703, %v725
        %v741 = vmul.f32 %v707, %v729
        %v742 = vmul.f32 %v709, %v729
        %v743 = vmul.f32 %v713, %v733
        %v744 = vmul.f32 %v715, %v733
        %v745 = vmul.f32 %v719, %v737
        %v746 = vmul.f32 %v721, %v737
        %747 = vset.pattern.permute.xlu0 3
        %748 = vperm.xlu0 %747, %v231
        %v749 = vpop.permute.xlu0 %748
        %751 = vset.pattern.permute.xlu0 3
        %752 = vperm.xlu0 %751, %v232
        %v753 = vpop.permute.xlu0 %752
        %755 = vset.pattern.permute.xlu0 3
        %756 = vperm.xlu0 %755, %v233
        %v757 = vpop.permute.xlu0 %756
        %759 = vset.pattern.permute.xlu0 3
        %760 = vperm.xlu0 %759, %v234
        %v761 = vpop.permute.xlu0 %760
        %v763 = vadd.f32 %v739, %v749
        %v764 = vadd.f32 %v740, %v749
        %v765 = vadd.f32 %v741, %v753
        %v766 = vadd.f32 %v742, %v753
        %v767 = vadd.f32 %v743, %v757
        %v768 = vadd.f32 %v744, %v757
        %v769 = vadd.f32 %v745, %v761
        %v770 = vadd.f32 %v746, %v761
        %v771 = vmul.f32 %v763, 0.5
        %v772 = vmul.f32 %v764, 0.5
        %v773 = vmul.f32 %v765, 0.5
        %v774 = vmul.f32 %v766, 0.5
        %v775 = vmul.f32 %v767, 0.5
        %v776 = vmul.f32 %v768, 0.5
        %v777 = vmul.f32 %v769, 0.5
        %v778 = vmul.f32 %v770, 0.5
        %v779 = vmul.f32 %v763, 0.044715
        %v780 = vmul.f32 %v764, 0.044715
        %v781 = vmul.f32 %v765, 0.044715
        %v782 = vmul.f32 %v766, 0.044715
        %v783 = vmul.f32 %v767, 0.044715
        %v784 = vmul.f32 %v768, 0.044715
        %v785 = vmul.f32 %v769, 0.044715
        %v786 = vmul.f32 %v770, 0.044715
        %v787 = vmul.f32 %v779, %v763
        %v788 = vmul.f32 %v780, %v764
        %v789 = vmul.f32 %v781, %v765
        %v790 = vmul.f32 %v782, %v766
        %v791 = vmul.f32 %v783, %v767
        %v792 = vmul.f32 %v784, %v768
        %v793 = vmul.f32 %v785, %v769
        %v794 = vmul.f32 %v786, %v770
        %v795 = vmul.f32 %v787, %v763
        %v796 = vmul.f32 %v788, %v764
        %v797 = vmul.f32 %v789, %v765
        %v798 = vmul.f32 %v790, %v766
        %v799 = vmul.f32 %v791, %v767
        %v800 = vmul.f32 %v792, %v768
        %v801 = vmul.f32 %v793, %v769
        %v802 = vmul.f32 %v794, %v770
        %v803 = vadd.f32 %v763, %v795
        %v804 = vadd.f32 %v764, %v796
        %v805 = vadd.f32 %v765, %v797
        %v806 = vadd.f32 %v766, %v798
        %v807 = vadd.f32 %v767, %v799
        %v808 = vadd.f32 %v768, %v800
        %v809 = vadd.f32 %v769, %v801
        %v810 = vadd.f32 %v770, %v802
        %v811 = vmul.f32 %v803, 0.7978846
        %v812 = vmul.f32 %v804, 0.7978846
        %v813 = vmul.f32 %v805, 0.7978846
        %v814 = vmul.f32 %v806, 0.7978846
        %v815 = vmul.f32 %v807, 0.7978846
        %v816 = vmul.f32 %v808, 0.7978846
        %v817 = vmul.f32 %v809, 0.7978846
        %v818 = vmul.f32 %v810, 0.7978846
        %v819 = vtanh.pop %v811
        %v820 = vtanh.pop %v812
        %v821 = vtanh.pop %v813
        %v822 = vtanh.pop %v814
        %v823 = vtanh.pop %v815
        %v824 = vtanh.pop %v816
        %v825 = vtanh.pop %v817
        %v826 = vtanh.pop %v818
        %v827 = vadd.f32 %v819, 1.0
        %v828 = vadd.f32 %v820, 1.0
        %v829 = vadd.f32 %v821, 1.0
        %v830 = vadd.f32 %v822, 1.0
        %v831 = vadd.f32 %v823, 1.0
        %v832 = vadd.f32 %v824, 1.0
        %v833 = vadd.f32 %v825, 1.0
        %v834 = vadd.f32 %v826, 1.0
        %v835 = vmul.f32 %v771, %v827
        %v836 = vmul.f32 %v772, %v828
        %v837 = vmul.f32 %v773, %v829
        %v838 = vmul.f32 %v774, %v830
        %v839 = vmul.f32 %v775, %v831
        %v840 = vmul.f32 %v776, %v832
        %v841 = vmul.f32 %v777, %v833
        %v842 = vmul.f32 %v778, %v834
        %843 = vst [vmem:[%s230] sm:$0xff] %v835
        %844 = vst [vmem:[%s230 + $0x8] sm:$0xff] %v836
        %845 = vst [vmem:[%s230 + $0x10] sm:$0xff] %v837
        %846 = vst [vmem:[%s230 + $0x18] sm:$0xff] %v838
        %847 = vst [vmem:[%s230 + $0x20] sm:$0xff] %v839
        %848 = vst [vmem:[%s230 + $0x28] sm:$0xff] %v840
        %849 = vst [vmem:[%s230 + $0x30] sm:$0xff] %v841
        %850 = vst [vmem:[%s230 + $0x38] sm:$0xff] %v842
        %s851 = sand.u32 %s119, 1
        %s852 = scalar_lea.sflag [#allocation4], %s851
        %s853 = sand.u32 %s119, 1
        %s854 = smul.addr %s853, 64
        %s855 = scalar_lea.vmem [#allocation7], %s854
        // Predicated region
        $region45: #{tpu_custom_call.1} parent=35 // pred_check
          %p856 = pneg %p129
        $region46: #{tpu_custom_call.1} parent=35 // pred_check_branch
          %858 = sbr.rel (%p856) target = $region48
        $region47: #{tpu_custom_call.1} parent=35 // pred_region
          %s860 = ssub.s32 1024, 1024
          %861 = vsyncadd %s852, %s860
          %s862 = smul.addr %s22, 8
          %s863 = smul.addr %s862, 128
          %s864 = scalar_lea.hbm %s4, %s863
          %s865 = sshll.u32 %s855, 4
          %s866 = int_to_ptr.vmem [resolvable:$true] %s865
          %871 = dma.vmem_to_hbm [thread:$0]  %s866, 1024, %s864, %s852, 256, 256, 16
        $region48: #{tpu_custom_call.1} parent=35 // pred_fallthru
          _
      $region36: #{tpu_custom_call.1} parent=5 // pred_fallthru
        _
      %p872 = scmp.le.s32.totalorder 2, %s17
      // Predicated region
      $region49: #{tpu_custom_call.1} parent=5 // pred_check
        %p873 = pneg %p872
      $region50: #{tpu_custom_call.1} parent=5 // pred_check_branch
        %875 = sbr.rel (%p873) target = $region52
      $region51: #{tpu_custom_call.1} parent=5 // pred_region
        %s876 = ssub.s32 %s17, 2
        // Predicated region
        $region53: #{tpu_custom_call.1} parent=51 // pred_check
          %p877 = pneg %p135
        $region54: #{tpu_custom_call.1} parent=51 // pred_check_branch
          %879 = sbr.rel (%p877) target = $region56
        $region55: #{tpu_custom_call.1} parent=51 // pred_region
          %s880 = sand.u32 %s120, 1
          %s881 = scalar_lea.sflag [#allocation4], %s880
          %s882 = sand.u32 %s120, 1
          %s883 = smul.addr %s882, 64
          %s884 = scalar_lea.vmem [#allocation7], %s883
          %885 = dma.done %s881, 1024
        $region56: #{tpu_custom_call.1} parent=51 // pred_fallthru
          _
      $region52: #{tpu_custom_call.1} parent=5 // pred_fallthru
        _
    $region6: #{tpu_custom_call.1} parent=1 // loop_footer
      %s21 = sadd.s32 1, %s17
    $region7: #{tpu_custom_call.1} parent=1 // loop_footer_branch
      %16 = sbr.rel target = $region3
    $region8: #{tpu_custom_call.1} parent=1 // loop_exit
      _
    %886 = vsyncpa [#allocation3], 1
    %s887 = scalar_lea.sflag [#allocation3], 1
    %888 = vsyncpa %s887, 1
    %889 = vsyncpa [#allocation6], 1
    %890 = vsyncpa [#allocation4], 1
    %s891 = scalar_lea.sflag [#allocation4], 1
    %892 = vsyncpa %s891, 1

</llo_original>
